<compile_context>
chip_gen: v6e
topology: v6e:2x2x1
jax: 0.10.0
libtpu: 0.0.40
codegen_flags: <defaults>
</compile_context>

<pallas_src>
import jax
import jax.numpy as jnp
from jax.experimental import pallas as pl
from jax.experimental.pallas import tpu as pltpu


# ----------------------------------------------------------------------------
# Kernel factory (L, TL, n_lt, need_mask are static at trace time).
# Grid: (B, num_L_tiles).  Per step the block is one batch's TL sequence
# positions; activations live channels-first (20, TL) so the last (lane) dim is
# the sequence and stays dense.
# ----------------------------------------------------------------------------
def _make_kernel(L, TL, n_lt, need_mask):
    L_f = float(L)
    last = n_lt - 1
    valid_in_last = L - last * TL          # static: #valid columns of last tile

    def kernel(d_ref, r_ref, wfd_ref, wfr_ref, bf_ref, w2_ref, b2_ref,
               w3_ref, b3_ref, out_ref, acc_ref):
        lt = pl.program_id(1)

        @pl.when(lt == 0)
        def _():
            acc_ref[...] = jnp.zeros_like(acc_ref)

        d = d_ref[0]                                  # (1, TL)
        r = r_ref[0]                                  # (1, TL)

        # fused static_encoder + fc1 (exact linear fold), VPU MAC, lane-dense
        h = wfd_ref[...] * d + wfr_ref[...] * r + bf_ref[...]        # (20, TL)
        h = jnp.maximum(h, 0.0)

        # fc2: single MXU matmul with lane-dense output (20, TL)
        h = jnp.dot(w2_ref[...], h, preferred_element_type=jnp.float32) \
            + b2_ref[...]
        h = jnp.maximum(h, 0.0)

        if need_mask:
            # only the last tile contains padded sequence positions
            @pl.when(lt == last)
            def _():
                col = jax.lax.broadcasted_iota(jnp.int32, (1, TL), 1)
                acc_ref[...] += jnp.where(col < valid_in_last, h, 0.0)

            @pl.when(lt != last)
            def _():
                acc_ref[...] += h
        else:
            # element-wise accumulation across tiles (VPU); lane reduction is
            # deferred to the finalize step below.
            acc_ref[...] += h

        @pl.when(lt == last)
        def _():
            # single length reduction (lane/XLU) + fc3 on the reduced vector:
            # out = (sum_l h2[:, l]) @ w3 + L * b3
            s20 = jnp.sum(acc_ref[...], axis=1, keepdims=True)            # (20, 1)
            s = jnp.sum(s20 * w3_ref[...], axis=0, keepdims=True)         # (1, 1)
            out_ref[...] = (s + L_f * b3_ref[...]).reshape(1, 1, 1)

    return kernel


# ----------------------------------------------------------------------------
# Wrapper: slicing + (tiny) weight fusion stay in plain JAX; the hot path runs
# in the Pallas kernel.
# ----------------------------------------------------------------------------
def state_critic_forward(Q_DIAG, Q_RC, params, *, max_tile=8192):
    # [:, :, 1:] of the PyTorch code; keep the size-1 channel dim so block
    # shapes never split the last two dims in unaligned ways.
    d = Q_DIAG[:, :, 1:].astype(jnp.float32)          # (B, 1, L)
    r = Q_RC[:, :, 1:].astype(jnp.float32)            # (B, 1, L)
    B, _, L = d.shape

    # --- exact algebraic fusion: encoder (no activation) folded into fc1 ---
    wf = params['wenc'] @ params['w1']                            # (2, 20)
    bf = params['benc'] @ params['w1'] + params['b1']             # (1, 20)

    wfd = wf[0].reshape(20, 1)
    wfr = wf[1].reshape(20, 1)
    bfc = bf.reshape(20, 1)
    w2t = params['w2'].T                                          # (out, in)
    b2c = params['b2'].reshape(20, 1)
    w3c = params['w3'].reshape(20, 1)
    b3c = params['b3'].reshape(1, 1)

    # --- sequence tiling (lane dim).  TL is either the full L or a multiple
    # of 128; padded positions are masked inside the kernel (last tile only). ---
    if L <= max_tile:
        TL, n_lt, L_pad = L, 1, L
    else:
        TL = max_tile                                  # multiple of 128
        n_lt = -(-L // TL)
        L_pad = n_lt * TL
    need_mask = (L_pad != L)
    if need_mask:
        pad = ((0, 0), (0, 0), (0, L_pad - L))
        d = jnp.pad(d, pad)
        r = jnp.pad(r, pad)

    seq_spec = pl.BlockSpec((1, 1, TL), lambda b, lt: (b, 0, lt))
    w_spec = lambda shape: pl.BlockSpec(shape, lambda b, lt: (0, 0))

    out = pl.pallas_call(
        _make_kernel(L, TL, n_lt, need_mask),
        out_shape=jax.ShapeDtypeStruct((B, 1, 1), jnp.float32),
        grid_spec=pltpu.PrefetchScalarGridSpec(
            num_scalar_prefetch=0,
            grid=(B, n_lt),
            in_specs=[
                seq_spec,                 # Q_DIAG slice
                seq_spec,                 # Q_RC slice
                w_spec((20, 1)),          # fused W column for diag feature
                w_spec((20, 1)),          # fused W column for rc feature
                w_spec((20, 1)),          # fused bias
                w_spec((20, 20)),         # fc2 weight (out, in)
                w_spec((20, 1)),          # fc2 bias
                w_spec((20, 1)),          # fc3 weight
                w_spec((1, 1)),           # fc3 bias
            ],
            out_specs=pl.BlockSpec((1, 1, 1), lambda b, lt: (b, 0, 0)),
            scratch_shapes=[pltpu.VMEM((20, TL), jnp.float32)],
        ),
        compiler_params=pltpu.CompilerParams(
            dimension_semantics=("parallel", "arbitrary")),
    )(d, r, wfd, wfr, bfc, w2t, b2c, w3c, b3c)

    return out.reshape(B, 1)


# ----------------------------------------------------------------------------
# Deterministic parameter construction (xavier_uniform weights, PyTorch default
# uniform biases).  Weights stored as (in, out) — the wrapper re-orients them.
# ----------------------------------------------------------------------------
def make_params(hidden_size, key):
    def xavier(k, in_c, out_c):
        bound = (6.0 / (in_c + out_c)) ** 0.5
        return jax.random.uniform(k, (in_c, out_c), jnp.float32, -bound, bound)

    def bias(k, in_c, out_c):
        bound = 1.0 / (in_c ** 0.5)
        return jax.random.uniform(k, (1, out_c), jnp.float32, -bound, bound)

    ks = jax.random.split(key, 8)
    return {
        'wenc': xavier(ks[0], 2, hidden_size),
        'benc': bias(ks[1], 2, hidden_size),
        'w1':   xavier(ks[2], hidden_size, 20),
        'b1':   bias(ks[3], hidden_size, 20),
        'w2':   xavier(ks[4], 20, 20),
        'b2':   bias(ks[5], 20, 20),
        'w3':   xavier(ks[6], 20, 1),
        'b3':   bias(ks[7], 20, 1),
    }


# Pure-JAX reference (unfused) for correctness checking.
def state_critic_ref(Q_DIAG, Q_RC, p):
    static = jnp.concatenate([Q_DIAG, Q_RC], axis=1)[:, :, 1:]
    x = jnp.transpose(static, (0, 2, 1)).astype(jnp.float32)
    h = x @ p['wenc'] + p['benc']
    h = jnp.maximum(h @ p['w1'] + p['b1'], 0.0)
    h = jnp.maximum(h @ p['w2'] + p['b2'], 0.0)
    h = h @ p['w3'] + p['b3']
    return jnp.sum(h, axis=1)


if __name__ == "__main__":
    key = jax.random.PRNGKey(0)
    k_params, k_diag, k_rc, k_diag2, k_rc2 = jax.random.split(key, 5)

    B, N, hidden_size = 2, 9, 32          # seq N=9 -> effective length L=8
    params = make_params(hidden_size, k_params)

    # --- small case: single L tile, no padding ---
    Q_DIAG = jax.random.normal(k_diag, (B, 1, N), jnp.float32)
    Q_RC = jax.random.normal(k_rc, (B, 1, N), jnp.float32)
    out = state_critic_forward(Q_DIAG, Q_RC, params)
    jax.block_until_ready(out)
    ref = state_critic_ref(Q_DIAG, Q_RC, params)
    assert out.shape == (B, 1)
    assert jnp.allclose(out, ref, rtol=1e-4, atol=1e-4)

    # --- tiled case: forces multi-tile grid, padding + last-tile masking ---
    N2 = 301                               # L=300 -> 3 tiles of 128 (padded)
    Q_DIAG2 = jax.random.normal(k_diag2, (B, 1, N2), jnp.float32)
    Q_RC2 = jax.random.normal(k_rc2, (B, 1, N2), jnp.float32)
    out2 = state_critic_forward(Q_DIAG2, Q_RC2, params, max_tile=128)
    jax.block_until_ready(out2)
    ref2 = state_critic_ref(Q_DIAG2, Q_RC2, params)
    assert out2.shape == (B, 1)
    assert jnp.allclose(out2, ref2, rtol=1e-4, atol=1e-4)

    print("KERNEL_OK")
</pallas_src>

<mosaic_0001>
module attributes {stable_mosaic.version = 11 : i64} {
  func.func @kernel(%arg0: i32, %arg1: i32, %arg2: memref<1x1x8xf32, #tpu.memory_space<vmem>>, %arg3: memref<1x1x8xf32, #tpu.memory_space<vmem>>, %arg4: memref<20x1xf32, #tpu.memory_space<vmem>>, %arg5: memref<20x1xf32, #tpu.memory_space<vmem>>, %arg6: memref<20x1xf32, #tpu.memory_space<vmem>>, %arg7: memref<20x20xf32, #tpu.memory_space<vmem>>, %arg8: memref<20x1xf32, #tpu.memory_space<vmem>>, %arg9: memref<20x1xf32, #tpu.memory_space<vmem>>, %arg10: memref<1x1xf32, #tpu.memory_space<vmem>>, %arg11: memref<1x1x1xf32, #tpu.memory_space<vmem>>, %arg12: memref<20x8xf32, #tpu.memory_space<vmem>>) attributes {dimension_semantics = [#tpu.dimension_semantics<parallel>, #tpu.dimension_semantics<arbitrary>], iteration_bounds = array<i64: 2, 1>, scalar_prefetch = 0 : i64, scratch_operands = 1 : i64, tpu.core_type = #tpu.core_type<tc>, window_params = [{transform_indices = @transform_0, window_bounds = array<i64: 1, 1, 8>}, {transform_indices = @transform_1, window_bounds = array<i64: 1, 1, 8>}, {pipeline_mode = #tpu.pipeline_mode<synchronous>, transform_indices = @transform_2, window_bounds = array<i64: 20, 1>}, {pipeline_mode = #tpu.pipeline_mode<synchronous>, transform_indices = @transform_3, window_bounds = array<i64: 20, 1>}, {pipeline_mode = #tpu.pipeline_mode<synchronous>, transform_indices = @transform_4, window_bounds = array<i64: 20, 1>}, {pipeline_mode = #tpu.pipeline_mode<synchronous>, transform_indices = @transform_5, window_bounds = array<i64: 20, 20>}, {pipeline_mode = #tpu.pipeline_mode<synchronous>, transform_indices = @transform_6, window_bounds = array<i64: 20, 1>}, {pipeline_mode = #tpu.pipeline_mode<synchronous>, transform_indices = @transform_7, window_bounds = array<i64: 20, 1>}, {pipeline_mode = #tpu.pipeline_mode<synchronous>, transform_indices = @transform_8, window_bounds = array<i64: 1, 1>}, {transform_indices = @transform_9, window_bounds = array<i64: 1, 1, 1>}]} {
    %c0_i32 = arith.constant 0 : i32
    %0 = arith.cmpi eq, %arg1, %c0_i32 : i32
    %1 = arith.extui %0 : i1 to i32
    %c0_i32_0 = arith.constant 0 : i32
    %2 = arith.cmpi ne, %1, %c0_i32_0 : i32
    scf.if %2 {
      %cst_24 = arith.constant 0.000000e+00 : f32
      %34 = vector.broadcast %cst_24 : f32 to vector<20x8xf32>
      %c0_25 = arith.constant 0 : index
      %c0_26 = arith.constant 0 : index
      %35 = vector.load %arg12[%c0_25, %c0_26] : memref<20x8xf32, #tpu.memory_space<vmem>>, vector<20x8xf32>
      tpu.vector_store %arg12[%c0_25, %c0_26], %34 {strides = array<i32>} : memref<20x8xf32, #tpu.memory_space<vmem>>, vector<20x8xf32>,
    } else {
    }
    %c0 = arith.constant 0 : index
    %c0_1 = arith.constant 0 : index
    %c0_2 = arith.constant 0 : index
    %3 = vector.load %arg2[%c0, %c0_1, %c0_2] : memref<1x1x8xf32, #tpu.memory_space<vmem>>, vector<1x1x8xf32>
    %4 = vector.shape_cast %3 : vector<1x1x8xf32> to vector<1x8xf32>
    %c0_3 = arith.constant 0 : index
    %c0_4 = arith.constant 0 : index
    %c0_5 = arith.constant 0 : index
    %5 = vector.load %arg3[%c0_3, %c0_4, %c0_5] : memref<1x1x8xf32, #tpu.memory_space<vmem>>, vector<1x1x8xf32>
    %6 = vector.shape_cast %5 : vector<1x1x8xf32> to vector<1x8xf32>
    %c0_6 = arith.constant 0 : index
    %c0_7 = arith.constant 0 : index
    %7 = vector.load %arg4[%c0_6, %c0_7] : memref<20x1xf32, #tpu.memory_space<vmem>>, vector<20x1xf32>
    %8 = vector.broadcast %7 : vector<20x1xf32> to vector<20x8xf32>
    %9 = vector.broadcast %4 : vector<1x8xf32> to vector<20x8xf32>
    %10 = arith.mulf %8, %9 : vector<20x8xf32>
    %c0_8 = arith.constant 0 : index
    %c0_9 = arith.constant 0 : index
    %11 = vector.load %arg5[%c0_8, %c0_9] : memref<20x1xf32, #tpu.memory_space<vmem>>, vector<20x1xf32>
    %12 = vector.broadcast %11 : vector<20x1xf32> to vector<20x8xf32>
    %13 = vector.broadcast %6 : vector<1x8xf32> to vector<20x8xf32>
    %14 = arith.mulf %12, %13 : vector<20x8xf32>
    %15 = arith.addf %10, %14 : vector<20x8xf32>
    %c0_10 = arith.constant 0 : index
    %c0_11 = arith.constant 0 : index
    %16 = vector.load %arg6[%c0_10, %c0_11] : memref<20x1xf32, #tpu.memory_space<vmem>>, vector<20x1xf32>
    %17 = vector.broadcast %16 : vector<20x1xf32> to vector<20x8xf32>
    %18 = arith.addf %15, %17 : vector<20x8xf32>
    %cst = arith.constant 0.000000e+00 : f32
    %19 = vector.broadcast %cst : f32 to vector<20x8xf32>
    %20 = arith.maximumf %18, %19 : vector<20x8xf32>
    %c0_12 = arith.constant 0 : index
    %c0_13 = arith.constant 0 : index
    %21 = vector.load %arg7[%c0_12, %c0_13] : memref<20x20xf32, #tpu.memory_space<vmem>>, vector<20x20xf32>
    %cst_14 = arith.constant dense<0.000000e+00> : vector<20x8xf32>
    %22 = tpu.matmul %21, %20, %cst_14 {dimension_numbers = #tpu.dot_dimension_numbers<[1], [0], [0], [1], [0, 0, 1, 1], [], []>} : vector<20x20xf32>, vector<20x8xf32>, vector<20x8xf32> -> vector<20x8xf32>
    %c0_15 = arith.constant 0 : index
    %c0_16 = arith.constant 0 : index
    %23 = vector.load %arg8[%c0_15, %c0_16] : memref<20x1xf32, #tpu.memory_space<vmem>>, vector<20x1xf32>
    %24 = vector.broadcast %23 : vector<20x1xf32> to vector<20x8xf32>
    %25 = arith.addf %22, %24 : vector<20x8xf32>
    %cst_17 = arith.constant 0.000000e+00 : f32
    %26 = vector.broadcast %cst_17 : f32 to vector<20x8xf32>
    %27 = arith.maximumf %25, %26 : vector<20x8xf32>
    %c0_18 = arith.constant 0 : index
    %c0_19 = arith.constant 0 : index
    %28 = vector.load %arg12[%c0_18, %c0_19] : memref<20x8xf32, #tpu.memory_space<vmem>>, vector<20x8xf32>
    %29 = arith.addf %28, %27 : vector<20x8xf32>
    %c0_20 = arith.constant 0 : index
    %c0_21 = arith.constant 0 : index
    %30 = vector.load %arg12[%c0_20, %c0_21] : memref<20x8xf32, #tpu.memory_space<vmem>>, vector<20x8xf32>
    tpu.vector_store %arg12[%c0_20, %c0_21], %29 {strides = array<i32>} : memref<20x8xf32, #tpu.memory_space<vmem>>, vector<20x8xf32>,
    %c0_i32_22 = arith.constant 0 : i32
    %31 = arith.cmpi eq, %arg1, %c0_i32_22 : i32
    %32 = arith.extui %31 : i1 to i32
    %c0_i32_23 = arith.constant 0 : i32
    %33 = arith.cmpi ne, %32, %c0_i32_23 : i32
    scf.if %33 {
      %c0_24 = arith.constant 0 : index
      %c0_25 = arith.constant 0 : index
      %34 = vector.load %arg12[%c0_24, %c0_25] : memref<20x8xf32, #tpu.memory_space<vmem>>, vector<20x8xf32>
      %cst_26 = arith.constant dense<0.000000e+00> : vector<20xf32>
      %35 = vector.multi_reduction <add>, %34, %cst_26 [1] : vector<20x8xf32> to vector<20xf32>
      %36 = vector.shape_cast %35 : vector<20xf32> to vector<20x1xf32>
      %c0_27 = arith.constant 0 : index
      %c0_28 = arith.constant 0 : index
      %37 = vector.load %arg9[%c0_27, %c0_28] : memref<20x1xf32, #tpu.memory_space<vmem>>, vector<20x1xf32>
      %38 = arith.mulf %36, %37 : vector<20x1xf32>
      %cst_29 = arith.constant dense<0.000000e+00> : vector<1xf32>
      %39 = vector.multi_reduction <add>, %38, %cst_29 [0] : vector<20x1xf32> to vector<1xf32>
      %40 = vector.shape_cast %39 : vector<1xf32> to vector<1x1xf32>
      %c0_30 = arith.constant 0 : index
      %c0_31 = arith.constant 0 : index
      %41 = vector.load %arg10[%c0_30, %c0_31] : memref<1x1xf32, #tpu.memory_space<vmem>>, vector<1x1xf32>
      %cst_32 = arith.constant 8.000000e+00 : f32
      %42 = vector.broadcast %cst_32 : f32 to vector<1x1xf32>
      %43 = arith.mulf %42, %41 : vector<1x1xf32>
      %44 = arith.addf %40, %43 : vector<1x1xf32>
      %45 = vector.shape_cast %44 : vector<1x1xf32> to vector<1x1x1xf32>
      %c0_33 = arith.constant 0 : index
      %c0_34 = arith.constant 0 : index
      %c0_35 = arith.constant 0 : index
      %46 = vector.load %arg11[%c0_33, %c0_34, %c0_35] : memref<1x1x1xf32, #tpu.memory_space<vmem>>, vector<1x1x1xf32>
      tpu.vector_store %arg11[%c0_33, %c0_34, %c0_35], %45 {strides = array<i32>} : memref<1x1x1xf32, #tpu.memory_space<vmem>>, vector<1x1x1xf32>,
    } else {
    }
    return
  }
  func.func @transform_0(%arg0: i32, %arg1: i32) -> (i32, i32, i32) {
    %c0_i32 = arith.constant 0 : i32
    %c0_i32_0 = arith.constant 0 : i32
    return %arg0, %c0_i32, %arg1 : i32, i32, i32
  }
  func.func @transform_1(%arg0: i32, %arg1: i32) -> (i32, i32, i32) {
    %c0_i32 = arith.constant 0 : i32
    %c0_i32_0 = arith.constant 0 : i32
    return %arg0, %c0_i32, %arg1 : i32, i32, i32
  }
  func.func @transform_2(%arg0: i32, %arg1: i32) -> (i32, i32) {
    %c0_i32 = arith.constant 0 : i32
    %c0_i32_0 = arith.constant 0 : i32
    %c0_i32_1 = arith.constant 0 : i32
    return %c0_i32, %c0_i32_0 : i32, i32
  }
  func.func @transform_3(%arg0: i32, %arg1: i32) -> (i32, i32) {
    %c0_i32 = arith.constant 0 : i32
    %c0_i32_0 = arith.constant 0 : i32
    %c0_i32_1 = arith.constant 0 : i32
    return %c0_i32, %c0_i32_0 : i32, i32
  }
  func.func @transform_4(%arg0: i32, %arg1: i32) -> (i32, i32) {
    %c0_i32 = arith.constant 0 : i32
    %c0_i32_0 = arith.constant 0 : i32
    %c0_i32_1 = arith.constant 0 : i32
    return %c0_i32, %c0_i32_0 : i32, i32
  }
  func.func @transform_5(%arg0: i32, %arg1: i32) -> (i32, i32) {
    %c0_i32 = arith.constant 0 : i32
    %c0_i32_0 = arith.constant 0 : i32
    %c0_i32_1 = arith.constant 0 : i32
    return %c0_i32, %c0_i32_0 : i32, i32
  }
  func.func @transform_6(%arg0: i32, %arg1: i32) -> (i32, i32) {
    %c0_i32 = arith.constant 0 : i32
    %c0_i32_0 = arith.constant 0 : i32
    %c0_i32_1 = arith.constant 0 : i32
    return %c0_i32, %c0_i32_0 : i32, i32
  }
  func.func @transform_7(%arg0: i32, %arg1: i32) -> (i32, i32) {
    %c0_i32 = arith.constant 0 : i32
    %c0_i32_0 = arith.constant 0 : i32
    %c0_i32_1 = arith.constant 0 : i32
    return %c0_i32, %c0_i32_0 : i32, i32
  }
  func.func @transform_8(%arg0: i32, %arg1: i32) -> (i32, i32) {
    %c0_i32 = arith.constant 0 : i32
    %c0_i32_0 = arith.constant 0 : i32
    %c0_i32_1 = arith.constant 0 : i32
    return %c0_i32, %c0_i32_0 : i32, i32
  }
  func.func @transform_9(%arg0: i32, %arg1: i32) -> (i32, i32, i32) {
    %c0_i32 = arith.constant 0 : i32
    %c0_i32_0 = arith.constant 0 : i32
    %c0_i32_1 = arith.constant 0 : i32
    return %arg0, %c0_i32, %c0_i32_0 : i32, i32, i32
  }
}

</mosaic_0001>

<llo_original>
// kernel: tpu_custom_call.1
$region0: #{tpu_custom_call.1}
  #allocation0 [shape = 'u32[]', space=smem, size = 0x4, offset = 0x4, fixed_abs, tag = 'smem constant byte address 0x4 - core index']
  #allocation1 [shape = 'u32[144,128]{1,0:T(1,128)}', space=vmem, size = 0x12000, scoped, tag = 'internal scratch']
  #allocation2 [shape = 'f32[20,8]{1,0:T(8,128)}', space=vmem, size = 0x3000, scoped, tag = 'scratch operand']
  #allocation3 [shape = 'f32[1,1]{1,0:T(1,128)S(1)}', space=vmem, size = 0x200, scoped, tag = 'scoped memory for tpu_custom_call.1']
  %s0 = inlined_call_operand.vmem [shape: f32[2,1,8], index: 0, kind: input, shape index: {}]
  %s1 = inlined_call_operand.vmem [shape: f32[2,1,8], index: 1, kind: input, shape index: {}]
  %s2 = inlined_call_operand.vmem [shape: f32[20,1], index: 2, kind: input, shape index: {}]
  %s3 = inlined_call_operand.vmem [shape: f32[20,1], index: 3, kind: input, shape index: {}]
  %s4 = inlined_call_operand.vmem [shape: f32[20,1], index: 4, kind: input, shape index: {}]
  %s5 = inlined_call_operand.vmem [shape: f32[20,20], index: 5, kind: input, shape index: {}]
  %s6 = inlined_call_operand.vmem [shape: f32[20,1], index: 6, kind: input, shape index: {}]
  %s7 = inlined_call_operand.vmem [shape: f32[20,1], index: 7, kind: input, shape index: {}]
  %s8 = inlined_call_operand.<no memory space> [shape: f32[1,1], index: 8, kind: input, shape index: {}]
  %s9 = inlined_call_operand.vmem [shape: f32[2,1,1], index: 9, kind: output, shape index: {}]
  %s10 = sld [smem:[#allocation0]]
  $region77: #{tpu_custom_call.1} parent=0
    _
  %s12 = ssub.s32 1, %s10
  %s13 = scalar_select 0, %s12, %s10
  %v14 = vstv %s8
  %15 = vst [vmem:[#allocation3] sm:$0x1] %v14
  loop: start=0, step=1, limit=4
  $region2: #{tpu_custom_call.1} parent=0 // loop_pre_header
    _
  $region3: #{tpu_custom_call.1} parent=0 // loop_header
    %s17 = sphi 0, %s21
    %p18 = scmp.ge.s32.totalorder %s17, 4
    %s24 = sphi 0, %s36
    %s25 = sphi 0, %s32
    %s26 = sphi 0, %s24
    %s27 = sphi 0, %s25
    %s28 = sphi 0, %s26
    %s29 = sphi 0, %s27
    %s41 = sphi 0, %s43
    %s44 = sphi 0, %s41
    %s45 = sphi 0, %s44
    %s61 = sphi 0, %s45
    %s69 = sphi 0, %s71
    %s72 = sphi 0, %s69
    %s73 = sphi 0, %s72
    %s89 = sphi 0, %s73
    %s93 = sphi 0, %s93
    %s95 = sphi 0, %s93
    %s96 = sphi 0, %s95
    %s110 = sphi 0, %s96
    %s114 = sphi 0, %s114
    %s116 = sphi 0, %s114
    %s117 = sphi 0, %s116
    %s131 = sphi 0, %s117
    %s135 = sphi 0, %s135
    %s137 = sphi 0, %s135
    %s138 = sphi 0, %s137
    %s152 = sphi 0, %s138
    %s156 = sphi 0, %s156
    %s158 = sphi 0, %s156
    %s159 = sphi 0, %s158
    %s173 = sphi 0, %s159
    %s177 = sphi 0, %s177
    %s179 = sphi 0, %s177
    %s180 = sphi 0, %s179
    %s194 = sphi 0, %s180
    %s198 = sphi 0, %s198
    %s200 = sphi 0, %s198
    %s201 = sphi 0, %s200
    %s215 = sphi 0, %s201
    %s219 = sphi 0, %s219
    %s221 = sphi 0, %s219
    %s222 = sphi 0, %s221
    %s236 = sphi 0, %s222
    %s242 = sphi 0, %s244
    %s245 = sphi 0, %s242
    %s246 = sphi 0, %s245
    %s262 = sphi 0, %s246
  $region4: #{tpu_custom_call.1} parent=0 // loop_header_branch
    %20 = sbr.rel (%p18) target = $region8
  $region5: #{tpu_custom_call.1} parent=0 // loop_body
    %s22 = ssub.s32 %s17, 1
    %s23 = ssub.s32 %s17, 2
    %s30 = sadd.s32 1, %s25
    %p31 = scmp.ge.s32.totalorder %s30, 1
    %s32 = scalar_select %p31, 0, %s30
    %s33 = sadd.s32 1, %s24
    %s34 = scalar_select %p31, %s33, %s24
    %p35 = scmp.ge.s32.totalorder %s34, 2
    %s36 = scalar_select %p35, 0, %s34
    %s37 = ssub.s32 %s24, %s36
    %s38 = ssub.s32 %s25, %s32
    %s39 = sor.u32 %s37, %s38
    %p40 = scmp.eq.s32.totalorder %s39, 0
    %s42 = sadd.s32 %s41, 1
    %s43 = scalar_select %p40, %s41, %s42
    %p46 = pneg %p40
    %p47 = scmp.eq.s32.totalorder %s17, 1
    %p48 = por %p46, %p47
    %p49 = scmp.ne.s32.totalorder %s41, %s44
    %p50 = scmp.eq.s32.totalorder %s17, 0
    %p51 = por %p49, %p50
    %p52 = scmp.ne.s32.totalorder %s41, %s44
    %p53 = scmp.eq.s32.totalorder %s22, 1
    %p54 = por %p52, %p53
    %p55 = scmp.ne.s32.totalorder %s44, %s45
    %p56 = scmp.eq.s32.totalorder %s22, 0
    %p57 = por %p55, %p56
    %p58 = scmp.ne.s32.totalorder %s44, %s45
    %p59 = scmp.eq.s32.totalorder %s23, 1
    %p60 = por %p58, %p59
    %p62 = scmp.ne.s32.totalorder %s45, %s61
    %p63 = scmp.eq.s32.totalorder %s23, 0
    %p64 = por %p62, %p63
    %s65 = ssub.s32 %s24, %s36
    %s66 = ssub.s32 %s25, %s32
    %s67 = sor.u32 %s65, %s66
    %p68 = scmp.eq.s32.totalorder %s67, 0
    %s70 = sadd.s32 %s69, 1
    %s71 = scalar_select %p68, %s69, %s70
    %p74 = pneg %p68
    %p75 = scmp.eq.s32.totalorder %s17, 1
    %p76 = por %p74, %p75
    %p77 = scmp.ne.s32.totalorder %s69, %s72
    %p78 = scmp.eq.s32.totalorder %s17, 0
    %p79 = por %p77, %p78
    %p80 = scmp.ne.s32.totalorder %s69, %s72
    %p81 = scmp.eq.s32.totalorder %s22, 1
    %p82 = por %p80, %p81
    %p83 = scmp.ne.s32.totalorder %s72, %s73
    %p84 = scmp.eq.s32.totalorder %s22, 0
    %p85 = por %p83, %p84
    %p86 = scmp.ne.s32.totalorder %s72, %s73
    %p87 = scmp.eq.s32.totalorder %s23, 1
    %p88 = por %p86, %p87
    %p90 = scmp.ne.s32.totalorder %s73, %s89
    %p91 = scmp.eq.s32.totalorder %s23, 0
    %p92 = por %p90, %p91
    %s94 = sadd.s32 %s93, 1
    %p97 = scmp.eq.s32.totalorder %s17, 1
    %p98 = scmp.ne.s32.totalorder %s93, %s95
    %p99 = scmp.eq.s32.totalorder %s17, 0
    %p100 = por %p98, %p99
    %p101 = scmp.ne.s32.totalorder %s93, %s95
    %p102 = scmp.eq.s32.totalorder %s22, 1
    %p103 = por %p101, %p102
    %p104 = scmp.ne.s32.totalorder %s95, %s96
    %p105 = scmp.eq.s32.totalorder %s22, 0
    %p106 = por %p104, %p105
    %p107 = scmp.ne.s32.totalorder %s95, %s96
    %p108 = scmp.eq.s32.totalorder %s23, 1
    %p109 = por %p107, %p108
    %p111 = scmp.ne.s32.totalorder %s96, %s110
    %p112 = scmp.eq.s32.totalorder %s23, 0
    %p113 = por %p111, %p112
    %s115 = sadd.s32 %s114, 1
    %p118 = scmp.eq.s32.totalorder %s17, 1
    %p119 = scmp.ne.s32.totalorder %s114, %s116
    %p120 = scmp.eq.s32.totalorder %s17, 0
    %p121 = por %p119, %p120
    %p122 = scmp.ne.s32.totalorder %s114, %s116
    %p123 = scmp.eq.s32.totalorder %s22, 1
    %p124 = por %p122, %p123
    %p125 = scmp.ne.s32.totalorder %s116, %s117
    %p126 = scmp.eq.s32.totalorder %s22, 0
    %p127 = por %p125, %p126
    %p128 = scmp.ne.s32.totalorder %s116, %s117
    %p129 = scmp.eq.s32.totalorder %s23, 1
    %p130 = por %p128, %p129
    %p132 = scmp.ne.s32.totalorder %s117, %s131
    %p133 = scmp.eq.s32.totalorder %s23, 0
    %p134 = por %p132, %p133
    %s136 = sadd.s32 %s135, 1
    %p139 = scmp.eq.s32.totalorder %s17, 1
    %p140 = scmp.ne.s32.totalorder %s135, %s137
    %p141 = scmp.eq.s32.totalorder %s17, 0
    %p142 = por %p140, %p141
    %p143 = scmp.ne.s32.totalorder %s135, %s137
    %p144 = scmp.eq.s32.totalorder %s22, 1
    %p145 = por %p143, %p144
    %p146 = scmp.ne.s32.totalorder %s137, %s138
    %p147 = scmp.eq.s32.totalorder %s22, 0
    %p148 = por %p146, %p147
    %p149 = scmp.ne.s32.totalorder %s137, %s138
    %p150 = scmp.eq.s32.totalorder %s23, 1
    %p151 = por %p149, %p150
    %p153 = scmp.ne.s32.totalorder %s138, %s152
    %p154 = scmp.eq.s32.totalorder %s23, 0
    %p155 = por %p153, %p154
    %s157 = sadd.s32 %s156, 1
    %p160 = scmp.eq.s32.totalorder %s17, 1
    %p161 = scmp.ne.s32.totalorder %s156, %s158
    %p162 = scmp.eq.s32.totalorder %s17, 0
    %p163 = por %p161, %p162
    %p164 = scmp.ne.s32.totalorder %s156, %s158
    %p165 = scmp.eq.s32.totalorder %s22, 1
    %p166 = por %p164, %p165
    %p167 = scmp.ne.s32.totalorder %s158, %s159
    %p168 = scmp.eq.s32.totalorder %s22, 0
    %p169 = por %p167, %p168
    %p170 = scmp.ne.s32.totalorder %s158, %s159
    %p171 = scmp.eq.s32.totalorder %s23, 1
    %p172 = por %p170, %p171
    %p174 = scmp.ne.s32.totalorder %s159, %s173
    %p175 = scmp.eq.s32.totalorder %s23, 0
    %p176 = por %p174, %p175
    %s178 = sadd.s32 %s177, 1
    %p181 = scmp.eq.s32.totalorder %s17, 1
    %p182 = scmp.ne.s32.totalorder %s177, %s179
    %p183 = scmp.eq.s32.totalorder %s17, 0
    %p184 = por %p182, %p183
    %p185 = scmp.ne.s32.totalorder %s177, %s179
    %p186 = scmp.eq.s32.totalorder %s22, 1
    %p187 = por %p185, %p186
    %p188 = scmp.ne.s32.totalorder %s179, %s180
    %p189 = scmp.eq.s32.totalorder %s22, 0
    %p190 = por %p188, %p189
    %p191 = scmp.ne.s32.totalorder %s179, %s180
    %p192 = scmp.eq.s32.totalorder %s23, 1
    %p193 = por %p191, %p192
    %p195 = scmp.ne.s32.totalorder %s180, %s194
    %p196 = scmp.eq.s32.totalorder %s23, 0
    %p197 = por %p195, %p196
    %s199 = sadd.s32 %s198, 1
    %p202 = scmp.eq.s32.totalorder %s17, 1
    %p203 = scmp.ne.s32.totalorder %s198, %s200
    %p204 = scmp.eq.s32.totalorder %s17, 0
    %p205 = por %p203, %p204
    %p206 = scmp.ne.s32.totalorder %s198, %s200
    %p207 = scmp.eq.s32.totalorder %s22, 1
    %p208 = por %p206, %p207
    %p209 = scmp.ne.s32.totalorder %s200, %s201
    %p210 = scmp.eq.s32.totalorder %s22, 0
    %p211 = por %p209, %p210
    %p212 = scmp.ne.s32.totalorder %s200, %s201
    %p213 = scmp.eq.s32.totalorder %s23, 1
    %p214 = por %p212, %p213
    %p216 = scmp.ne.s32.totalorder %s201, %s215
    %p217 = scmp.eq.s32.totalorder %s23, 0
    %p218 = por %p216, %p217
    %s220 = sadd.s32 %s219, 1
    %p223 = scmp.eq.s32.totalorder %s17, 1
    %p224 = scmp.ne.s32.totalorder %s219, %s221
    %p225 = scmp.eq.s32.totalorder %s17, 0
    %p226 = por %p224, %p225
    %p227 = scmp.ne.s32.totalorder %s219, %s221
    %p228 = scmp.eq.s32.totalorder %s22, 1
    %p229 = por %p227, %p228
    %p230 = scmp.ne.s32.totalorder %s221, %s222
    %p231 = scmp.eq.s32.totalorder %s22, 0
    %p232 = por %p230, %p231
    %p233 = scmp.ne.s32.totalorder %s221, %s222
    %p234 = scmp.eq.s32.totalorder %s23, 1
    %p235 = por %p233, %p234
    %p237 = scmp.ne.s32.totalorder %s222, %s236
    %p238 = scmp.eq.s32.totalorder %s23, 0
    %p239 = por %p237, %p238
    %s240 = ssub.s32 %s24, %s36
    %p241 = scmp.eq.s32.totalorder %s240, 0
    %s243 = sadd.s32 %s242, 1
    %s244 = scalar_select %p241, %s242, %s243
    %p247 = pneg %p241
    %p248 = scmp.eq.s32.totalorder %s17, 1
    %p249 = por %p247, %p248
    %p250 = scmp.ne.s32.totalorder %s242, %s245
    %p251 = scmp.eq.s32.totalorder %s17, 0
    %p252 = por %p250, %p251
    %p253 = scmp.ne.s32.totalorder %s242, %s245
    %p254 = scmp.eq.s32.totalorder %s22, 1
    %p255 = por %p253, %p254
    %p256 = scmp.ne.s32.totalorder %s245, %s246
    %p257 = scmp.eq.s32.totalorder %s22, 0
    %p258 = por %p256, %p257
    %p259 = scmp.ne.s32.totalorder %s245, %s246
    %p260 = scmp.eq.s32.totalorder %s23, 1
    %p261 = por %p259, %p260
    %p263 = scmp.ne.s32.totalorder %s246, %s262
    %p264 = scmp.eq.s32.totalorder %s23, 0
    %p265 = por %p263, %p264
    %p266 = scmp.le.s32.totalorder 1, %s17
    %p267 = scmp.lt.s32.totalorder %s17, 3
    %p268 = pnand %p266, %p267
    %p269 = pneg %p268
    // Predicated region
    $region9: #{tpu_custom_call.1} parent=5 // pred_check
      _
    $region10: #{tpu_custom_call.1} parent=5 // pred_check_branch
      %271 = sbr.rel (%p268) target = $region12
    $region11: #{tpu_custom_call.1} parent=5 // pred_region
      %s272 = ssub.s32 %s17, 1
      // Predicated region
      $region13: #{tpu_custom_call.1} parent=11 // pred_check
        %p273 = pneg %p106
      $region14: #{tpu_custom_call.1} parent=11 // pred_check_branch
        %275 = sbr.rel (%p273) target = $region16
      $region15: #{tpu_custom_call.1} parent=11 // pred_region
        _
      $region16: #{tpu_custom_call.1} parent=11 // pred_fallthru
        _
      // Predicated region
      $region17: #{tpu_custom_call.1} parent=11 // pred_check
        %p276 = pneg %p127
      $region18: #{tpu_custom_call.1} parent=11 // pred_check_branch
        %278 = sbr.rel (%p276) target = $region20
      $region19: #{tpu_custom_call.1} parent=11 // pred_region
        _
      $region20: #{tpu_custom_call.1} parent=11 // pred_fallthru
        _
      // Predicated region
      $region21: #{tpu_custom_call.1} parent=11 // pred_check
        %p279 = pneg %p148
      $region22: #{tpu_custom_call.1} parent=11 // pred_check_branch
        %281 = sbr.rel (%p279) target = $region24
      $region23: #{tpu_custom_call.1} parent=11 // pred_region
        _
      $region24: #{tpu_custom_call.1} parent=11 // pred_fallthru
        _
      // Predicated region
      $region25: #{tpu_custom_call.1} parent=11 // pred_check
        %p282 = pneg %p169
      $region26: #{tpu_custom_call.1} parent=11 // pred_check_branch
        %284 = sbr.rel (%p282) target = $region28
      $region27: #{tpu_custom_call.1} parent=11 // pred_region
        _
      $region28: #{tpu_custom_call.1} parent=11 // pred_fallthru
        _
      // Predicated region
      $region29: #{tpu_custom_call.1} parent=11 // pred_check
        %p285 = pneg %p190
      $region30: #{tpu_custom_call.1} parent=11 // pred_check_branch
        %287 = sbr.rel (%p285) target = $region32
      $region31: #{tpu_custom_call.1} parent=11 // pred_region
        _
      $region32: #{tpu_custom_call.1} parent=11 // pred_fallthru
        _
      // Predicated region
      $region33: #{tpu_custom_call.1} parent=11 // pred_check
        %p288 = pneg %p211
      $region34: #{tpu_custom_call.1} parent=11 // pred_check_branch
        %290 = sbr.rel (%p288) target = $region36
      $region35: #{tpu_custom_call.1} parent=11 // pred_region
        _
      $region36: #{tpu_custom_call.1} parent=11 // pred_fallthru
        _
      // Predicated region
      $region37: #{tpu_custom_call.1} parent=11 // pred_check
        %p291 = pneg %p232
      $region38: #{tpu_custom_call.1} parent=11 // pred_check_branch
        %293 = sbr.rel (%p291) target = $region40
      $region39: #{tpu_custom_call.1} parent=11 // pred_region
        _
      $region40: #{tpu_custom_call.1} parent=11 // pred_fallthru
        _
    $region12: #{tpu_custom_call.1} parent=5 // pred_fallthru
      _
    %p294 = scmp.lt.s32.totalorder %s17, 2
    // Predicated region
    $region41: #{tpu_custom_call.1} parent=5 // pred_check
      %p295 = pneg %p294
    $region42: #{tpu_custom_call.1} parent=5 // pred_check_branch
      %297 = sbr.rel (%p295) target = $region44
    $region43: #{tpu_custom_call.1} parent=5 // pred_region
      // Predicated region
      $region45: #{tpu_custom_call.1} parent=43 // pred_check
        %p298 = pneg %p51
      $region46: #{tpu_custom_call.1} parent=43 // pred_check_branch
        %300 = sbr.rel (%p298) target = $region48
      $region47: #{tpu_custom_call.1} parent=43 // pred_region
        %p301 = scmp.lt.s32.totalorder %s24, 1
        %s302 = scalar_select %p301, %s24, 1
        %p303 = scmp.lt.s32.totalorder %s25, 0
        %s304 = scalar_select %p303, %s25, 0
        %s305 = sadd.s32 %s304, %s302
        %s306 = scalar_lea.vmem %s0, %s305
      $region48: #{tpu_custom_call.1} parent=43 // pred_fallthru
        _
      // Predicated region
      $region49: #{tpu_custom_call.1} parent=43 // pred_check
        %p307 = pneg %p79
      $region50: #{tpu_custom_call.1} parent=43 // pred_check_branch
        %309 = sbr.rel (%p307) target = $region52
      $region51: #{tpu_custom_call.1} parent=43 // pred_region
        %p310 = scmp.lt.s32.totalorder %s24, 1
        %s311 = scalar_select %p310, %s24, 1
        %p312 = scmp.lt.s32.totalorder %s25, 0
        %s313 = scalar_select %p312, %s25, 0
        %s314 = sadd.s32 %s313, %s311
        %s315 = scalar_lea.vmem %s1, %s314
      $region52: #{tpu_custom_call.1} parent=43 // pred_fallthru
        _
    $region44: #{tpu_custom_call.1} parent=5 // pred_fallthru
      _
    %p316 = scmp.le.s32.totalorder 1, %s17
    %p317 = scmp.lt.s32.totalorder %s17, 3
    %p318 = pnand %p316, %p317
    %p319 = pneg %p318
    // Predicated region
    $region53: #{tpu_custom_call.1} parent=5 // pred_check
      _
    $region54: #{tpu_custom_call.1} parent=5 // pred_check_branch
      %321 = sbr.rel (%p318) target = $region56
    $region55: #{tpu_custom_call.1} parent=5 // pred_region
      %s322 = ssub.s32 %s17, 1
      %p323 = scmp.lt.s32.totalorder %s26, 1
      %s324 = scalar_select %p323, %s26, 1
      %p325 = scmp.lt.s32.totalorder %s27, 0
      %s326 = scalar_select %p325, %s27, 0
      %s327 = sadd.s32 %s326, %s324
      %s328 = scalar_lea.vmem %s0, %s327
      %p329 = pneg %p57
      %p330 = pneg %p54
      %p331 = scmp.lt.s32.totalorder %s26, 1
      %s332 = scalar_select %p331, %s26, 1
      %p333 = scmp.lt.s32.totalorder %s27, 0
      %s334 = scalar_select %p333, %s27, 0
      %s335 = sadd.s32 %s334, %s332
      %s336 = scalar_lea.vmem %s1, %s335
      %p337 = pneg %p85
      %p338 = pneg %p82
      %p339 = pneg %p106
      %p340 = pneg %p103
      %p341 = pneg %p127
      %p342 = pneg %p124
      %p343 = pneg %p148
      %p344 = pneg %p145
      %p345 = pneg %p169
      %p346 = pneg %p166
      %p347 = pneg %p190
      %p348 = pneg %p187
      %p349 = pneg %p211
      %p350 = pneg %p208
      %p351 = pneg %p232
      %p352 = pneg %p229
      %p353 = pneg %p258
      %p354 = pneg %p255
      %p355 = scmp.lt.s32.totalorder %s26, 1
      %s356 = scalar_select %p355, %s26, 1
      %s357 = scalar_lea.vmem %s9, %s356
      %p358 = scmp.lt.s32.totalorder %s26, 1
      %s359 = scalar_select %p358, %s26, 1
      %p360 = scmp.lt.s32.totalorder %s27, 0
      %s361 = scalar_select %p360, %s27, 0
      %s362 = sadd.s32 %s361, %s359
      %s363 = scalar_lea.vmem %s0, %s362
      %p364 = scmp.lt.s32.totalorder %s26, 1
      %s365 = scalar_select %p364, %s26, 1
      %p366 = scmp.lt.s32.totalorder %s27, 0
      %s367 = scalar_select %p366, %s27, 0
      %s368 = sadd.s32 %s367, %s365
      %s369 = scalar_lea.vmem %s1, %s368
      %p370 = scmp.lt.s32.totalorder %s26, 1
      %s371 = scalar_select %p370, %s26, 1
      %s372 = scalar_lea.vmem %s9, %s371
      %p373 = scmp.eq.s32.totalorder %s27, 0
      // Predicated region
      $region57: #{tpu_custom_call.1} parent=55 // pred_check
        %p374 = pneg %p373
      $region58: #{tpu_custom_call.1} parent=55 // pred_check_branch
        %376 = sbr.rel (%p374) target = $region60
      $region59: #{tpu_custom_call.1} parent=55 // pred_region
        %vm377 = vcmask 64512
        %378 = vst.msk [vmem:[#allocation2] sm:$0xff] %vm377, 0.0
        %379 = vst.msk [vmem:[#allocation2 + $0x8] sm:$0xff] %vm377, 0.0
        %vm380 = vcmask 60416
        %381 = vst.msk [vmem:[#allocation2 + $0x10] sm:$0xf] %vm380, 0.0
      $region60: #{tpu_custom_call.1} parent=55 // pred_fallthru
        _
      %v382 = vld [vmem:[%s363] sm:$0x1]
      %v383 = vld [vmem:[%s369] sm:$0x1]
      %v384 = vld [vmem:[%s2] sm:$0xff]
      %v385 = vld [vmem:[%s2 + $0x8] sm:$0xff]
      %v386 = vld [vmem:[%s2 + $0x10] sm:$0xf]
      %388 = vset.pattern.permute.xlu0 0
      %389 = vperm.xlu0 %388, %v384
      %v390 = vpop.permute.xlu0 %389
      %393 = vset.pattern.permute.xlu0 0
      %394 = vperm.xlu0 %393, %v385
      %v395 = vpop.permute.xlu0 %394
      %398 = vset.pattern.permute.xlu0 0
      %399 = vperm.xlu0 %398, %v386
      %v400 = vpop.permute.xlu0 %399
      %v403 = vlaneseq
      %v404 = vshrl.u32 %v403, 7
      %v405 = vsub.s32 0, %v404
      %v406 = vrot.slane %v382, %v405
      %v408 = vmul.f32 %v390, %v406
      %v409 = vmul.f32 %v395, %v406
      %v410 = vmul.f32 %v400, %v406
      %v411 = vld [vmem:[%s3] sm:$0xff]
      %v412 = vld [vmem:[%s3 + $0x8] sm:$0xff]
      %v413 = vld [vmem:[%s3 + $0x10] sm:$0xf]
      %415 = vset.pattern.permute.xlu0 0
      %416 = vperm.xlu0 %415, %v411
      %v417 = vpop.permute.xlu0 %416
      %420 = vset.pattern.permute.xlu0 0
      %421 = vperm.xlu0 %420, %v412
      %v422 = vpop.permute.xlu0 %421
      %425 = vset.pattern.permute.xlu0 0
      %426 = vperm.xlu0 %425, %v413
      %v427 = vpop.permute.xlu0 %426
      %v430 = vlaneseq
      %v431 = vshrl.u32 %v430, 7
      %v432 = vsub.s32 0, %v431
      %v433 = vrot.slane %v383, %v432
      %v435 = vmul.f32 %v417, %v433
      %v436 = vmul.f32 %v422, %v433
      %v437 = vmul.f32 %v427, %v433
      %v438 = vadd.f32 %v408, %v435
      %v439 = vadd.f32 %v409, %v436
      %v440 = vadd.f32 %v410, %v437
      %v441 = vld [vmem:[%s4] sm:$0xff]
      %v442 = vld [vmem:[%s4 + $0x8] sm:$0xff]
      %v443 = vld [vmem:[%s4 + $0x10] sm:$0xf]
      %445 = vset.pattern.permute.xlu0 0
      %446 = vperm.xlu0 %445, %v441
      %v447 = vpop.permute.xlu0 %446
      %450 = vset.pattern.permute.xlu0 0
      %451 = vperm.xlu0 %450, %v442
      %v452 = vpop.permute.xlu0 %451
      %455 = vset.pattern.permute.xlu0 0
      %456 = vperm.xlu0 %455, %v443
      %v457 = vpop.permute.xlu0 %456
      %v459 = vadd.f32 %v438, %v447
      %v460 = vadd.f32 %v439, %v452
      %v461 = vadd.f32 %v440, %v457
      %v462 = vmax.f32 %v459, 0.0
      %v463 = vmax.f32 %v460, 0.0
      %v464 = vmax.f32 %v461, 0.0
      %v465 = vld [vmem:[%s5] sm:$0xff]
      %v466 = vld [vmem:[%s5 + $0x8] sm:$0xff]
      %v467 = vld [vmem:[%s5 + $0x10] sm:$0xf]
      %v468 = vld [vmem:[%s6] sm:$0xff]
      %v469 = vld [vmem:[%s6 + $0x8] sm:$0xff]
      %v470 = vld [vmem:[%s6 + $0x10] sm:$0xf]
      %472 = vset.pattern.permute.xlu0 0
      %473 = vperm.xlu0 %472, %v468
      %v474 = vpop.permute.xlu0 %473
      %477 = vset.pattern.permute.xlu0 0
      %478 = vperm.xlu0 %477, %v469
      %v479 = vpop.permute.xlu0 %478
      %482 = vset.pattern.permute.xlu0 0
      %483 = vperm.xlu0 %482, %v470
      %v484 = vpop.permute.xlu0 %483
      %vm486 = vcmask 162816
      %v488 = vsel %vm486, %v465, 0
      %v491 = vsel %vm486, %v466, 0
      %v494 = vsel %vm486, %v467, 0
      %vm496 = vcmask 1043456
      %v498 = vsel %vm496, %v464, 0
      %500 = vmatprep.subr.mxu0 0.0
      %501 = vmatpush1.msra.mxu0 0.0
      %502 = vmatprep.subr.mxu0 0.0
      %503 = vmatpush1.msra.mxu0 0.0
      %504 = vmatprep.subr.mxu0 0.0
      %505 = vmatpush1.msra.mxu0 0.0
      %506 = vmatprep.subr.mxu0 0.0
      %507 = vmatpush1.msra.mxu0 0.0
      %508 = vmatprep.subr.mxu0 0.0
      %509 = vmatpush1.msra.mxu0 0.0
      %510 = vmatprep.subr.mxu0 0.0
      %511 = vmatpush1.msra.mxu0 0.0
      %512 = vmatprep.subr.mxu0 0.0
      %513 = vmatpush1.msra.mxu0 0.0
      %514 = vmatprep.subr.mxu0 0.0
      %515 = vmatpush1.msra.mxu0 0.0
      %516 = vmatprep.subr.mxu0 0.0
      %517 = vmatpush1.msra.mxu0 0.0
      %518 = vmatprep.subr.mxu0 0.0
      %519 = vmatpush1.msra.mxu0 0.0
      %520 = vmatprep.subr.mxu0 0.0
      %521 = vmatpush1.msra.mxu0 0.0
      %522 = vmatprep.subr.mxu0 0.0
      %523 = vmatpush1.msra.mxu0 0.0
      %524 = vmatprep.subr.mxu0 0.0
      %525 = vmatpush1.msra.mxu0 0.0
      %526 = vmatprep.subr.mxu0 0.0
      %527 = vmatpush1.msra.mxu0 %v498
      %528 = vmatprep.subr.mxu0 0.0
      %529 = vmatpush1.msra.mxu0 %v463
      %530 = vmatprep.subr.mxu0 0.0
      %531 = vmatpush1.msra.mxu0 %v462
      %532 = vmatprep.subr.mxu0 0.0
      %533 = vmatpush2.msra.mxu0 0.0
      %534 = vmatprep.subr.mxu0 0.0
      %535 = vmatpush2.msra.mxu0 0.0
      %536 = vmatprep.subr.mxu0 0.0
      %537 = vmatpush2.msra.mxu0 0.0
      %538 = vmatprep.subr.mxu0 0.0
      %539 = vmatpush2.msra.mxu0 0.0
      %540 = vmatprep.subr.mxu0 0.0
      %541 = vmatpush2.msra.mxu0 0.0
      %542 = vmatprep.subr.mxu0 0.0
      %543 = vmatpush2.msra.mxu0 0.0
      %544 = vmatprep.subr.mxu0 0.0
      %545 = vmatpush2.msra.mxu0 0.0
      %546 = vmatprep.subr.mxu0 0.0
      %547 = vmatpush2.msra.mxu0 0.0
      %548 = vmatprep.subr.mxu0 0.0
      %549 = vmatpush2.msra.mxu0 0.0
      %550 = vmatprep.subr.mxu0 0.0
      %551 = vmatpush2.msra.mxu0 0.0
      %552 = vmatprep.subr.mxu0 0.0
      %553 = vmatpush2.msra.mxu0 0.0
      %554 = vmatprep.subr.mxu0 0.0
      %555 = vmatpush2.msra.mxu0 0.0
      %556 = vmatprep.subr.mxu0 0.0
      %557 = vmatpush2.msra.mxu0 0.0
      %558 = vmatprep.subr.mxu0 0.0
      %559 = vmatpush2.msra.mxu0 0.0
      %560 = vmatprep.subr.mxu0 0.0
      %561 = vmatpush2.msra.mxu0 0.0
      %562 = vmatprep.subr.mxu0 0.0
      %563 = vmatpush2.msra.mxu0 0.0
      %564 = vmatprep.mubr.f32.mxu0 0.0
      %565 = vmatmul.mubr.f32.gmra.mxu0 %v488
      %v566 = vpop.f32.mrf.mxu0
      %v567 = vadd.f32 %v474, %v566
      %v568 = vpop.f32.mrf.mxu0
      %569 = vmatprep.mubr.f32.mxu0 0.0
      %570 = vmatmul.mubr.f32.gmra.mxu0 %v491
      %v571 = vpop.f32.mrf.mxu0
      %v572 = vadd.f32 %v479, %v571
      %v573 = vpop.f32.mrf.mxu0
      %574 = vmatprep.mubr.f32.mxu0 0.0
      %575 = vmatmul.mubr.f32.gmra.mxu0 %v494
      %v576 = vpop.f32.mrf.mxu0
      %v577 = vadd.f32 %v484, %v576
      %v578 = vpop.f32.mrf.mxu0
      %579 = vdwg.mxu0
      %v580 = vmax.f32 %v567, 0.0
      %v581 = vmax.f32 %v572, 0.0
      %v582 = vmax.f32 %v577, 0.0
      %v583 = vld [vmem:[#allocation2] sm:$0xff]
      %v584 = vld [vmem:[#allocation2 + $0x8] sm:$0xff]
      %v585 = vld [vmem:[#allocation2 + $0x10] sm:$0xf]
      %v586 = vadd.f32 %v583, %v580
      %v587 = vadd.f32 %v584, %v581
      %v588 = vadd.f32 %v585, %v582
      %vm589 = vcmask 64512
      %590 = vst.msk [vmem:[#allocation2] sm:$0xff] %vm589, %v586
      %591 = vst.msk [vmem:[#allocation2 + $0x8] sm:$0xff] %vm589, %v587
      %vm592 = vcmask 60416
      %593 = vst.msk [vmem:[#allocation2 + $0x10] sm:$0xf] %vm592, %v588
      // Predicated region
      $region61: #{tpu_custom_call.1} parent=55 // pred_check
        %p594 = pneg %p373
      $region62: #{tpu_custom_call.1} parent=55 // pred_check_branch
        %596 = sbr.rel (%p594) target = $region64
      $region63: #{tpu_custom_call.1} parent=55 // pred_region
        %v597 = vld [vmem:[#allocation2] sm:$0xff]
        %v598 = vld [vmem:[#allocation2 + $0x8] sm:$0xff]
        %v599 = vld [vmem:[#allocation2 + $0x10] sm:$0xf]
        %v600 = vsel %vm589, %v597, 0.0
        %601 = vadd.xlane.f32.xlu0 %v600
        %v602 = vpop.xlane.xlu0 %601
        %v603 = vsel %vm589, %v598, 0.0
        %604 = vadd.xlane.f32.xlu0 %v603
        %v605 = vpop.xlane.xlu0 %604
        %v606 = vsel %vm592, %v599, 0.0
        %607 = vadd.xlane.f32.xlu0 %v606
        %v608 = vpop.xlane.xlu0 %607
        %v609 = vld [vmem:[%s7] sm:$0xff]
        %v610 = vld [vmem:[%s7 + $0x8] sm:$0xff]
        %v611 = vld [vmem:[%s7 + $0x10] sm:$0xf]
        %v612 = vmul.f32 %v602, %v609
        %v613 = vmul.f32 %v605, %v610
        %v614 = vmul.f32 %v608, %v611
        %vm615 = vcmask 7168
        %v616 = vsel %vm615, %v612, 0.0
        %v617 = vsel %vm615, %v613, 0.0
        %v618 = vadd.f32 %v616, %v617
        %vm619 = vcmask 3072
        %v620 = vsel %vm619, %v614, 0.0
        %v621 = vadd.f32 %v618, %v620
        %v622 = vrot.slane %v621, 4
        %v623 = vadd.f32 %v621, %v622
        %v624 = vrot.slane %v623, 2
        %v625 = vadd.f32 %v623, %v624
        %v626 = vrot.slane %v625, 1
        %v627 = vadd.f32 %v625, %v626
        %v628 = vld [vmem:[#allocation3] sm:$0x1]
        %v629 = vmul.f32 %v628, 8.0
        %v630 = vadd.f32 %v627, %v629
        %vm631 = vcmask 0
        %632 = vst.msk [vmem:[%s372] sm:$0x1] %vm631, %v630
      $region64: #{tpu_custom_call.1} parent=55 // pred_fallthru
        _
      %p633 = scmp.lt.s32.totalorder %s26, 1
      %s634 = scalar_select %p633, %s26, 1
      %s635 = scalar_lea.vmem %s9, %s634
      // Predicated region
      $region65: #{tpu_custom_call.1} parent=55 // pred_check
        %p636 = pneg %p255
      $region66: #{tpu_custom_call.1} parent=55 // pred_check_branch
        %638 = sbr.rel (%p636) target = $region68
      $region67: #{tpu_custom_call.1} parent=55 // pred_region
        _
      $region68: #{tpu_custom_call.1} parent=55 // pred_fallthru
        _
    $region56: #{tpu_custom_call.1} parent=5 // pred_fallthru
      _
    %p639 = scmp.le.s32.totalorder 2, %s17
    // Predicated region
    $region69: #{tpu_custom_call.1} parent=5 // pred_check
      %p640 = pneg %p639
    $region70: #{tpu_custom_call.1} parent=5 // pred_check_branch
      %642 = sbr.rel (%p640) target = $region72
    $region71: #{tpu_custom_call.1} parent=5 // pred_region
      %s643 = ssub.s32 %s17, 2
      // Predicated region
      $region73: #{tpu_custom_call.1} parent=71 // pred_check
        %p644 = pneg %p261
      $region74: #{tpu_custom_call.1} parent=71 // pred_check_branch
        %646 = sbr.rel (%p644) target = $region76
      $region75: #{tpu_custom_call.1} parent=71 // pred_region
        %p647 = scmp.lt.s32.totalorder %s28, 1
        %s648 = scalar_select %p647, %s28, 1
        %s649 = scalar_lea.vmem %s9, %s648
      $region76: #{tpu_custom_call.1} parent=71 // pred_fallthru
        _
    $region72: #{tpu_custom_call.1} parent=5 // pred_fallthru
      _
  $region6: #{tpu_custom_call.1} parent=0 // loop_footer
    %s21 = sadd.s32 1, %s17
  $region7: #{tpu_custom_call.1} parent=0 // loop_footer_branch
    %16 = sbr.rel target = $region3
  $region8: #{tpu_custom_call.1} parent=0 // loop_exit
    _

</llo_original>
